<compile_context>
chip_gen: v6e
topology: v6e:2x2x1
jax: 0.10.0
libtpu: 0.0.40
codegen_flags: <defaults>
</compile_context>

<pallas_src>
import math

import jax
import jax.numpy as jnp
from jax.experimental import pallas as pl
from jax.experimental.pallas import tpu as pltpu


def _pos_broadcast_kernel(w_ref, o_ref):
    """w_ref: (1, line*num_feats) lane-dense slab = weight[:line] flattened.
       o_ref: (batch_blk, line*num_feats) output slab for this grid step."""
    # The batch "repeat": sublane-broadcast the single flattened row across
    # this batch tile.  Stores are lane-dense (last dim = line*num_feats).
    o_ref[...] = jnp.broadcast_to(w_ref[...], o_ref.shape).astype(o_ref.dtype)


def _pick_batch_block(batch: int, row_bytes: int) -> int:
    """Pick the batch tile height.

    Targets: block ~0.5-2 MiB, >=4 grid steps when the output is large enough
    (so fill overlaps writeback and v7x's two TensorCores each get several
    steps), and 2x double-buffered block well inside v7x's VMEM budget.
    Legal heights: multiples of 8 dividing `batch` (sublane rule) or `batch`.
    """
    max_block_bytes = 2 << 20                      # 2 MiB -> 4 MiB double-buffered
    total_bytes = batch * row_bytes
    if total_bytes <= 2 * max_block_bytes:
        return batch                               # small output: one fat step is fine
    candidates = [d for d in range(8, batch, 8) if batch % d == 0]
    if not candidates:
        return batch                               # TODO(synk): ragged batch tiling
    good = [d for d in candidates
            if d * row_bytes <= max_block_bytes and batch // d >= 4]
    if good:
        return max(good)                           # biggest block under the cap
    return min(candidates)                         # keep double-buffering bounded


def learned_positional_encoding(weight: jax.Array, batch: int, line: int):
    """weight: (row_num_embed, num_feats) embedding table.
       Returns pos: (batch, line, num_feats) == weight[:line] repeated over batch."""
    row_num_embed, num_feats = weight.shape
    assert 0 < line <= row_num_embed, "line must be in (0, row_num_embed]"

    flat = line * num_feats
    # Wrapper-side layout plumbing (review-endorsed): slice the rows we need
    # and flatten them so the kernel sees/emits lane-dense slabs.
    w_slab = weight[:line].reshape(1, flat)

    dtype_bytes = jnp.dtype(weight.dtype).itemsize
    row_bytes = flat * dtype_bytes
    batch_blk = _pick_batch_block(batch, row_bytes)
    assert batch % batch_blk == 0
    grid_steps = batch // batch_blk

    out_flat = pl.pallas_call(
        _pos_broadcast_kernel,
        out_shape=jax.ShapeDtypeStruct((batch, flat), weight.dtype),
        grid_spec=pltpu.PrefetchScalarGridSpec(
            num_scalar_prefetch=0,
            grid=(grid_steps,),
            in_specs=[
                # Full (1, flat) slab; constant index_map -> stays VMEM-resident
                # across all grid steps (no re-DMA).
                pl.BlockSpec((1, flat), lambda b: (0, 0)),
            ],
            out_specs=pl.BlockSpec((batch_blk, flat), lambda b: (b, 0)),
        ),
        compiler_params=pltpu.CompilerParams(
            dimension_semantics=("parallel",),
        ),
        cost_estimate=pl.CostEstimate(
            flops=0,
            transcendentals=0,
            bytes_accessed=batch * row_bytes + row_bytes,
        ),
    )(w_slab)

    # Free contiguous reshape back to the PyTorch layout.
    return out_flat.reshape(batch, line, num_feats)


def _xavier_uniform(key, shape, dtype=jnp.float32):
    fan_in, fan_out = shape[0], shape[1]
    bound = math.sqrt(6.0 / (fan_in + fan_out))
    return jax.random.uniform(key, shape, dtype=dtype, minval=-bound, maxval=bound)


if __name__ == "__main__":
    key = jax.random.PRNGKey(0)
    k_small, k_big = jax.random.split(key)

    # --- Small config matching the module defaults: num_feats=32, row_num_embed=50.
    num_feats, row_num_embed = 32, 50
    batch, line = 2, 8
    w = _xavier_uniform(k_small, (row_num_embed, num_feats))
    pos = jax.block_until_ready(learned_positional_encoding(w, batch, line))
    ref = jnp.broadcast_to(w[:line], (batch, line, num_feats))
    assert pos.shape == (batch, line, num_feats)
    assert jnp.allclose(pos, ref, atol=1e-6), "small-config mismatch vs reference"

    # --- Larger config that exercises the batch-tiled, multi-step pipeline
    # (4 parallel grid steps of ~1.6 MiB lane-dense blocks).
    num_feats2, row_num_embed2 = 128, 50
    batch2, line2 = 256, 50
    w2 = _xavier_uniform(k_big, (row_num_embed2, num_feats2))
    pos2 = jax.block_until_ready(learned_positional_encoding(w2, batch2, line2))
    ref2 = jnp.broadcast_to(w2[:line2], (batch2, line2, num_feats2))
    assert pos2.shape == (batch2, line2, num_feats2)
    assert jnp.allclose(pos2, ref2, atol=1e-6), "tiled-config mismatch vs reference"

    print("KERNEL_OK")
</pallas_src>

<mosaic_0001>
module attributes {stable_mosaic.version = 11 : i64} {
  func.func @_pos_broadcast_kernel(%arg0: i32, %arg1: memref<1x256xf32, #tpu.memory_space<vmem>>, %arg2: memref<2x256xf32, #tpu.memory_space<vmem>>) attributes {dimension_semantics = [#tpu.dimension_semantics<parallel>], iteration_bounds = array<i64: 1>, scalar_prefetch = 0 : i64, scratch_operands = 0 : i64, tpu.core_type = #tpu.core_type<tc>, window_params = [{pipeline_mode = #tpu.pipeline_mode<synchronous>, transform_indices = @transform_0, window_bounds = array<i64: 1, 256>}, {transform_indices = @transform_1, window_bounds = array<i64: 2, 256>}]} {
    %c0 = arith.constant 0 : index
    %c0_0 = arith.constant 0 : index
    %0 = vector.load %arg1[%c0, %c0_0] : memref<1x256xf32, #tpu.memory_space<vmem>>, vector<1x256xf32>
    %1 = vector.shape_cast %0 : vector<1x256xf32> to vector<1x256xf32>
    %2 = vector.broadcast %1 : vector<1x256xf32> to vector<2x256xf32>
    %c0_1 = arith.constant 0 : index
    %c0_2 = arith.constant 0 : index
    %3 = vector.load %arg2[%c0_1, %c0_2] : memref<2x256xf32, #tpu.memory_space<vmem>>, vector<2x256xf32>
    tpu.vector_store %arg2[%c0_1, %c0_2], %2 {strides = array<i32>} : memref<2x256xf32, #tpu.memory_space<vmem>>, vector<2x256xf32>,
    return
  }
  func.func @transform_0(%arg0: i32) -> (i32, i32) {
    %c0_i32 = arith.constant 0 : i32
    %c0_i32_0 = arith.constant 0 : i32
    %c0_i32_1 = arith.constant 0 : i32
    return %c0_i32, %c0_i32_0 : i32, i32
  }
  func.func @transform_1(%arg0: i32) -> (i32, i32) {
    %c0_i32 = arith.constant 0 : i32
    %c0_i32_0 = arith.constant 0 : i32
    return %arg0, %c0_i32 : i32, i32
  }
}

</mosaic_0001>

<llo_original>
// kernel: tpu_custom_call.1
$region0: #{tpu_custom_call.1}
  #allocation0 [shape = 'u32[]', space=smem, size = 0x4, offset = 0x4, fixed_abs, tag = 'smem constant byte address 0x4 - core index']
  #allocation1 [shape = 'u32[144,128]{1,0:T(1,128)}', space=vmem, size = 0x12000, scoped, tag = 'internal scratch']
  %s0 = inlined_call_operand.hbm [shape: f32[1,256], index: 0, kind: input, shape index: {}]
  %s1 = inlined_call_operand.hbm [shape: f32[2,256], index: 1, kind: output, shape index: {}]
  %s2 = sld [smem:[#allocation0]]
  $region18: #{tpu_custom_call.1} parent=0
    _
  %s4 = ssub.s32 1, %s2
  %s5 = scalar_select 0, %s4, %s2
  $region1: #{tpu_custom_call.1} parent=0
    #allocation2 [shape = 'u8[1024]{0}', space=vmem, size = 0x400, scoped, tag = 'input window, operand 0, single buffered']
    #allocation3 [shape = 's32[1]{0}', space=sflag, size = 0x4, scoped, tag = 'scoped memory for tpu_custom_call.1']
    #allocation4 [shape = 's32[1]{0}', space=sflag, size = 0x4, scoped, tag = 'scoped memory for tpu_custom_call.1']
    #allocation5 [shape = 'u8[2048]{0}', space=vmem, size = 0x800, scoped, tag = 'output window, operand 0, single buffered']
    %6 = vsyncpa [#allocation3], 0
    %7 = vsyncpa [#allocation4], 0
    // Predicated region
    $region2: #{tpu_custom_call.1} parent=1 // pred_check
      _
    $region3: #{tpu_custom_call.1} parent=1 // pred_check_branch
      %9 = sbr.rel (0) target = $region5
    $region4: #{tpu_custom_call.1} parent=1 // pred_region
      %s11 = ssub.s32 32, 32
      %12 = vsyncadd [#allocation3], %s11
      %s14 = sshll.u32 [#allocation2], 4
      %s15 = int_to_ptr.vmem [resolvable:$true] %s14
      %17 = dma.hbm_to_vmem [thread:$0]  %s0, 32, %s15, [#allocation3]
    $region5: #{tpu_custom_call.1} parent=1 // pred_fallthru
      _
    // Predicated region
    $region6: #{tpu_custom_call.1} parent=1 // pred_check
      _
    $region7: #{tpu_custom_call.1} parent=1 // pred_check_branch
      %19 = sbr.rel (0) target = $region9
    $region8: #{tpu_custom_call.1} parent=1 // pred_region
      %20 = dma.done [#allocation3], 32
    $region9: #{tpu_custom_call.1} parent=1 // pred_fallthru
      _
    %v21 = vld [vmem:[#allocation2] sm:$0x3]
    %v23 = vlaneseq
    %v24 = vshrl.u32 %v23, 7
    %v25 = vsub.s32 0, %v24
    %v26 = vrot.slane %v21, %v25
    %v27 = vlaneseq
    %v28 = vshrl.u32 %v27, 7
    %v29 = vsub.s32 1, %v28
    %v30 = vrot.slane %v21, %v29
    %v31 = vcombine.low %v26, %v30
    %v33 = vunpack.c.l.s4 1983009808
    %v34 = vunpack.c.0.s8 %v33
    %v35 = vlaneseq
    %v36 = vshrl.u32 %v35, 7
    %v37 = vsub.s32 %v34, %v36
    %v38 = vrot.slane %v31, %v37
    %40 = vst [vmem:[#allocation5] sm:$0xf] %v38
    // Predicated region
    $region10: #{tpu_custom_call.1} parent=1 // pred_check
      _
    $region11: #{tpu_custom_call.1} parent=1 // pred_check_branch
      %42 = sbr.rel (0) target = $region13
    $region12: #{tpu_custom_call.1} parent=1 // pred_region
      %s44 = ssub.s32 64, 64
      %45 = vsyncadd [#allocation4], %s44
      %s47 = sshll.u32 [#allocation5], 4
      %s48 = int_to_ptr.vmem [resolvable:$true] %s47
      %50 = dma.vmem_to_hbm [thread:$0]  %s48, 64, %s1, [#allocation4]
    $region13: #{tpu_custom_call.1} parent=1 // pred_fallthru
      _
    // Predicated region
    $region14: #{tpu_custom_call.1} parent=1 // pred_check
      _
    $region15: #{tpu_custom_call.1} parent=1 // pred_check_branch
      %52 = sbr.rel (0) target = $region17
    $region16: #{tpu_custom_call.1} parent=1 // pred_region
      %53 = dma.done [#allocation4], 64
    $region17: #{tpu_custom_call.1} parent=1 // pred_fallthru
      _
    %54 = vsyncpa [#allocation3], 1
    %55 = vsyncpa [#allocation4], 1

</llo_original>
